<compile_context>
chip_gen: v5e
topology: v5e:2x2
jax: 0.10.0
libtpu: 0.0.40
codegen_flags: <defaults>
</compile_context>

<pallas_src>
import functools

import jax
import jax.numpy as jnp
from jax.experimental import pallas as pl
from jax.experimental.pallas import tpu as pltpu

_LANES = 128


def _lif_kernel(x_ref, out_ref, mem_ref, *, thresh, tau, t_blk):
    """Process t_blk consecutive frames of one row tile.

    x_ref / out_ref: (t_blk, row_blk, c_last) blocks.
    mem_ref: (row_blk, c_last) f32 VMEM scratch carrying the membrane
    potential across the serial inner (time-block) grid axis.
    """
    tb = pl.program_id(1)  # time-block axis (inner, serial)

    # Reset membrane potential at the first time block of this row tile.
    @pl.when(tb == 0)
    def _():
        mem_ref[...] = jnp.zeros_like(mem_ref)

    def step(i, carry):
        # LIF update: leak + integrate, threshold, hard reset.
        mem = mem_ref[...] * tau + x_ref[i].astype(jnp.float32)
        spiked = mem > thresh                      # == (mem - thresh) > 0
        out_ref[i] = spiked.astype(out_ref.dtype)  # ZIF forward: heaviside
        mem_ref[...] = jnp.where(spiked, 0.0, mem)
        return carry

    # Short fixed trip counts are fully unrolled for LLO scheduler visibility.
    jax.lax.fori_loop(0, t_blk, step, 0, unroll=(t_blk <= 8))


def _vmem_capacity_bytes():
    """Physical VMEM of the current chip; conservative default if unknown."""
    try:
        return int(pltpu.get_tpu_info().vmem_capacity_bytes)
    except Exception:  # not on TPU / API unavailable -> assume v7x-sized VMEM
        return 64 * 1024 * 1024


def _choose_layout(n_main, T, in_itemsize, out_itemsize):
    """Pick (c_last, rows, row_blk, t_blk, vmem_limit) for the kernel."""
    vmem_cap = _vmem_capacity_bytes()
    if vmem_cap >= 100 * 1024 * 1024:
        # v5e / v6e class: 128 MiB physical VMEM, single TensorCore.
        target_in_bytes = 8 * 1024 * 1024
        vmem_limit_cap = 96 * 1024 * 1024
        two_cores = False
    else:
        # v7x class: 64 MiB physical VMEM, 2 TensorCores per chip.
        target_in_bytes = 4 * 1024 * 1024
        vmem_limit_cap = 48 * 1024 * 1024
        two_cores = True

    # Sublane alignment per dtype: 8 for f32, 16 for bf16, 32 for int8/fp8.
    sublane = max(8, 32 // min(in_itemsize, out_itemsize))

    # Lane-dense last dim: largest candidate that still leaves >= sublane rows
    # (keeps vregs (8,128)-dense); otherwise fall back to the largest divisor.
    c_last = _LANES
    for cand in (4096, 2048, 1024, 512, 256, 128):
        if n_main % cand == 0 and n_main // cand >= sublane:
            c_last = cand
            break
    else:
        for cand in (4096, 2048, 1024, 512, 256, 128):
            if n_main % cand == 0:
                c_last = cand
                break
    rows = n_main // c_last

    # Row block: as large as the per-block byte budget allows.
    row_budget = max(sublane, target_in_bytes // (c_last * in_itemsize))
    row_blk = min(rows, row_budget)
    if two_cores and rows >= 2 * sublane:
        # Keep >= 2 row tiles so the "parallel" axis feeds both TensorCores.
        row_blk = min(row_blk, ((rows // 2) // sublane) * sublane)
    if row_blk < rows:
        row_blk = max(sublane, (row_blk // sublane) * sublane)
    else:
        row_blk = rows  # full extent: always a legal block shape

    # Time blocking: fold T_BLK frames per grid step when a single frame tile
    # is well under the byte budget (amortizes the ~0.35 us/step overhead).
    frame_blk_bytes = row_blk * c_last * in_itemsize
    t_blk = 1
    for d in range(1, T + 1):
        if T % d == 0 and d * frame_blk_bytes <= target_in_bytes:
            t_blk = d

    # Explicit VMEM budget: 2 input bufs + 2 output bufs + 1 mem tile.
    in_bytes = t_blk * row_blk * c_last * in_itemsize
    out_bytes = t_blk * row_blk * c_last * out_itemsize
    mem_bytes = row_blk * c_last * 4
    resident = 2 * in_bytes + 2 * out_bytes + mem_bytes
    vmem_limit = int(min(max(2 * resident, 32 * 1024 * 1024), vmem_limit_cap))

    return c_last, rows, row_blk, t_blk, vmem_limit


def lif_spike(x, thresh=1.0, tau=0.5, gama=1.0, spike_dtype=None):
    """Pallas implementation of LIFSpike.forward.

    x: [T, N, C, H, W] float32 (time-major). Returns spikes (0/1) of the same
    shape; dtype defaults to x.dtype (set spike_dtype=jnp.bfloat16 to halve
    output HBM traffic — 0/1 is exact in bf16).
    `gama` only affects the (not implemented) surrogate backward pass.
    """
    del gama  # forward-only
    thresh = float(thresh)
    tau = float(tau)

    T = x.shape[0]
    frame_shape = x.shape[1:]
    n_elem = 1
    for d in frame_shape:
        n_elem *= d

    out_dtype = jnp.dtype(spike_dtype) if spike_dtype is not None else x.dtype

    x_flat = x.reshape(T, n_elem)
    n_main = (n_elem // _LANES) * _LANES
    n_tail = n_elem - n_main

    # Sub-128-element-per-frame remainder: tiny plain-JAX scan epilogue
    # instead of padding/slicing the full tensor (saves whole-tensor HBM passes).
    def _tail(xt):  # xt: (T, n_tail)
        def step(mem, xrow):
            mem = mem * tau + xrow.astype(jnp.float32)
            spiked = mem > thresh
            return jnp.where(spiked, 0.0, mem), spiked.astype(out_dtype)

        _, spikes = jax.lax.scan(step, jnp.zeros((xt.shape[1],), jnp.float32), xt)
        return spikes

    if n_main == 0:  # frame smaller than one lane row: pure-JAX path
        return _tail(x_flat).reshape((T,) + frame_shape)

    in_itemsize = x.dtype.itemsize
    out_itemsize = jnp.dtype(out_dtype).itemsize
    c_last, rows, row_blk, t_blk, vmem_limit = _choose_layout(
        n_main, T, in_itemsize, out_itemsize)

    x_main = x_flat if n_tail == 0 else x_flat[:, :n_main]
    x_tiled = x_main.reshape(T, rows, c_last)

    n_row_tiles = pl.cdiv(rows, row_blk)
    n_time_blocks = T // t_blk

    kernel = functools.partial(_lif_kernel, thresh=thresh, tau=tau, t_blk=t_blk)

    out_tiled = pl.pallas_call(
        kernel,
        out_shape=jax.ShapeDtypeStruct((T, rows, c_last), out_dtype),
        grid_spec=pltpu.PrefetchScalarGridSpec(
            num_scalar_prefetch=0,
            # Row tiles outer (parallel, independent), time blocks inner
            # (serial: carries the membrane recurrence in VMEM scratch).
            grid=(n_row_tiles, n_time_blocks),
            in_specs=[
                pl.BlockSpec((t_blk, row_blk, c_last), lambda r, tb: (tb, r, 0))
            ],
            out_specs=pl.BlockSpec((t_blk, row_blk, c_last), lambda r, tb: (tb, r, 0)),
            scratch_shapes=[pltpu.VMEM((row_blk, c_last), jnp.float32)],
        ),
        compiler_params=pltpu.CompilerParams(
            dimension_semantics=("parallel", "arbitrary"),
            vmem_limit_bytes=vmem_limit,
        ),
    )(x_tiled)

    out_main = out_tiled.reshape(T, n_main)
    if n_tail:
        out_flat = jnp.concatenate([out_main, _tail(x_flat[:, n_main:])], axis=1)
    else:
        out_flat = out_main
    return out_flat.reshape((T,) + frame_shape)


def _lif_spike_ref(x, thresh=1.0, tau=0.5):
    """Pure-JAX reference matching the PyTorch loop."""
    T = x.shape[0]
    mem = jnp.zeros_like(x[0])
    outs = []
    for t in range(T):
        mem = mem * tau + x[t]
        spike = (mem - thresh > 0.0).astype(x.dtype)
        mem = (1.0 - spike) * mem
        outs.append(spike)
    return jnp.stack(outs, axis=0)


if __name__ == "__main__":
    # Small shapes: T=8 timesteps, batch=2, channels=4, spatial 16x16.
    T, N, C, H, W = 8, 2, 4, 16, 16
    key = jax.random.PRNGKey(0)
    x = jax.random.normal(key, (T, N, C, H, W), dtype=jnp.float32) * 2.0

    out = jax.block_until_ready(lif_spike(x, thresh=1.0, tau=0.5, gama=1.0))

    ref = _lif_spike_ref(x, thresh=1.0, tau=0.5)
    assert out.shape == (T, N, C, H, W), out.shape
    assert out.dtype == jnp.float32, out.dtype
    assert jnp.array_equal(out, ref), "Pallas LIFSpike mismatch vs reference"

    print("KERNEL_OK")
</pallas_src>

<mosaic_0001>
module attributes {stable_mosaic.version = 11 : i64} {
  func.func @_lif_kernel(%arg0: i32, %arg1: i32, %arg2: memref<8x8x256xf32, #tpu.memory_space<vmem>>, %arg3: memref<8x8x256xf32, #tpu.memory_space<vmem>>, %arg4: memref<8x256xf32, #tpu.memory_space<vmem>>) attributes {dimension_semantics = [#tpu.dimension_semantics<parallel>, #tpu.dimension_semantics<arbitrary>], iteration_bounds = array<i64: 1, 1>, scalar_prefetch = 0 : i64, scratch_operands = 1 : i64, tpu.core_type = #tpu.core_type<tc>, window_params = [{transform_indices = @transform_0, window_bounds = array<i64: 8, 8, 256>}, {transform_indices = @transform_1, window_bounds = array<i64: 8, 8, 256>}]} {
    %c0_i32 = arith.constant 0 : i32
    %0 = arith.cmpi eq, %arg1, %c0_i32 : i32
    %1 = arith.extui %0 : i1 to i32
    %c0_i32_0 = arith.constant 0 : i32
    %2 = arith.cmpi ne, %1, %c0_i32_0 : i32
    scf.if %2 {
      %cst_88 = arith.constant 0.000000e+00 : f32
      %147 = vector.broadcast %cst_88 : f32 to vector<8x256xf32>
      %c0_89 = arith.constant 0 : index
      %c0_90 = arith.constant 0 : index
      %148 = vector.load %arg4[%c0_89, %c0_90] : memref<8x256xf32, #tpu.memory_space<vmem>>, vector<8x256xf32>
      tpu.vector_store %arg4[%c0_89, %c0_90], %147 {strides = array<i32>} : memref<8x256xf32, #tpu.memory_space<vmem>>, vector<8x256xf32>,
    } else {
    }
    %c0_i32_1 = arith.constant 0 : i32
    %c0 = arith.constant 0 : index
    %c0_2 = arith.constant 0 : index
    %3 = vector.load %arg4[%c0, %c0_2] : memref<8x256xf32, #tpu.memory_space<vmem>>, vector<8x256xf32>
    %cst = arith.constant 5.000000e-01 : f32
    %4 = vector.broadcast %cst : f32 to vector<8x256xf32>
    %5 = arith.mulf %3, %4 : vector<8x256xf32>
    %6 = arith.index_cast %c0_i32_1 : i32 to index
    %c0_3 = arith.constant 0 : index
    %c0_4 = arith.constant 0 : index
    %7 = vector.load %arg2[%6, %c0_3, %c0_4] : memref<8x8x256xf32, #tpu.memory_space<vmem>>, vector<1x8x256xf32>
    %8 = vector.shape_cast %7 : vector<1x8x256xf32> to vector<8x256xf32>
    %9 = arith.addf %5, %8 : vector<8x256xf32>
    %cst_5 = arith.constant 1.000000e+00 : f32
    %10 = vector.broadcast %cst_5 : f32 to vector<8x256xf32>
    %11 = arith.cmpf ogt, %9, %10 : vector<8x256xf32>
    %12 = arith.extui %11 : vector<8x256xi1> to vector<8x256xi32>
    %13 = arith.sitofp %12 : vector<8x256xi32> to vector<8x256xf32>
    %14 = arith.index_cast %c0_i32_1 : i32 to index
    %c0_6 = arith.constant 0 : index
    %c0_7 = arith.constant 0 : index
    %15 = vector.load %arg3[%14, %c0_6, %c0_7] : memref<8x8x256xf32, #tpu.memory_space<vmem>>, vector<1x8x256xf32>
    %16 = vector.shape_cast %15 : vector<1x8x256xf32> to vector<8x256xf32>
    %17 = vector.shape_cast %13 : vector<8x256xf32> to vector<1x8x256xf32>
    tpu.vector_store %arg3[%14, %c0_6, %c0_7], %17 {strides = array<i32>} : memref<8x8x256xf32, #tpu.memory_space<vmem>>, vector<1x8x256xf32>,
    %cst_8 = arith.constant 0.000000e+00 : f32
    %18 = vector.broadcast %cst_8 : f32 to vector<8x256xf32>
    %19 = arith.select %11, %18, %9 : vector<8x256xi1>, vector<8x256xf32>
    %c0_9 = arith.constant 0 : index
    %c0_10 = arith.constant 0 : index
    %20 = vector.load %arg4[%c0_9, %c0_10] : memref<8x256xf32, #tpu.memory_space<vmem>>, vector<8x256xf32>
    tpu.vector_store %arg4[%c0_9, %c0_10], %19 {strides = array<i32>} : memref<8x256xf32, #tpu.memory_space<vmem>>, vector<8x256xf32>,
    %c1_i32 = arith.constant 1 : i32
    %c0_11 = arith.constant 0 : index
    %c0_12 = arith.constant 0 : index
    %21 = vector.load %arg4[%c0_11, %c0_12] : memref<8x256xf32, #tpu.memory_space<vmem>>, vector<8x256xf32>
    %cst_13 = arith.constant 5.000000e-01 : f32
    %22 = vector.broadcast %cst_13 : f32 to vector<8x256xf32>
    %23 = arith.mulf %21, %22 : vector<8x256xf32>
    %24 = arith.index_cast %c1_i32 : i32 to index
    %c0_14 = arith.constant 0 : index
    %c0_15 = arith.constant 0 : index
    %25 = vector.load %arg2[%24, %c0_14, %c0_15] : memref<8x8x256xf32, #tpu.memory_space<vmem>>, vector<1x8x256xf32>
    %26 = vector.shape_cast %25 : vector<1x8x256xf32> to vector<8x256xf32>
    %27 = arith.addf %23, %26 : vector<8x256xf32>
    %cst_16 = arith.constant 1.000000e+00 : f32
    %28 = vector.broadcast %cst_16 : f32 to vector<8x256xf32>
    %29 = arith.cmpf ogt, %27, %28 : vector<8x256xf32>
    %30 = arith.extui %29 : vector<8x256xi1> to vector<8x256xi32>
    %31 = arith.sitofp %30 : vector<8x256xi32> to vector<8x256xf32>
    %32 = arith.index_cast %c1_i32 : i32 to index
    %c0_17 = arith.constant 0 : index
    %c0_18 = arith.constant 0 : index
    %33 = vector.load %arg3[%32, %c0_17, %c0_18] : memref<8x8x256xf32, #tpu.memory_space<vmem>>, vector<1x8x256xf32>
    %34 = vector.shape_cast %33 : vector<1x8x256xf32> to vector<8x256xf32>
    %35 = vector.shape_cast %31 : vector<8x256xf32> to vector<1x8x256xf32>
    tpu.vector_store %arg3[%32, %c0_17, %c0_18], %35 {strides = array<i32>} : memref<8x8x256xf32, #tpu.memory_space<vmem>>, vector<1x8x256xf32>,
    %cst_19 = arith.constant 0.000000e+00 : f32
    %36 = vector.broadcast %cst_19 : f32 to vector<8x256xf32>
    %37 = arith.select %29, %36, %27 : vector<8x256xi1>, vector<8x256xf32>
    %c0_20 = arith.constant 0 : index
    %c0_21 = arith.constant 0 : index
    %38 = vector.load %arg4[%c0_20, %c0_21] : memref<8x256xf32, #tpu.memory_space<vmem>>, vector<8x256xf32>
    tpu.vector_store %arg4[%c0_20, %c0_21], %37 {strides = array<i32>} : memref<8x256xf32, #tpu.memory_space<vmem>>, vector<8x256xf32>,
    %c2_i32 = arith.constant 2 : i32
    %c0_22 = arith.constant 0 : index
    %c0_23 = arith.constant 0 : index
    %39 = vector.load %arg4[%c0_22, %c0_23] : memref<8x256xf32, #tpu.memory_space<vmem>>, vector<8x256xf32>
    %cst_24 = arith.constant 5.000000e-01 : f32
    %40 = vector.broadcast %cst_24 : f32 to vector<8x256xf32>
    %41 = arith.mulf %39, %40 : vector<8x256xf32>
    %42 = arith.index_cast %c2_i32 : i32 to index
    %c0_25 = arith.constant 0 : index
    %c0_26 = arith.constant 0 : index
    %43 = vector.load %arg2[%42, %c0_25, %c0_26] : memref<8x8x256xf32, #tpu.memory_space<vmem>>, vector<1x8x256xf32>
    %44 = vector.shape_cast %43 : vector<1x8x256xf32> to vector<8x256xf32>
    %45 = arith.addf %41, %44 : vector<8x256xf32>
    %cst_27 = arith.constant 1.000000e+00 : f32
    %46 = vector.broadcast %cst_27 : f32 to vector<8x256xf32>
    %47 = arith.cmpf ogt, %45, %46 : vector<8x256xf32>
    %48 = arith.extui %47 : vector<8x256xi1> to vector<8x256xi32>
    %49 = arith.sitofp %48 : vector<8x256xi32> to vector<8x256xf32>
    %50 = arith.index_cast %c2_i32 : i32 to index
    %c0_28 = arith.constant 0 : index
    %c0_29 = arith.constant 0 : index
    %51 = vector.load %arg3[%50, %c0_28, %c0_29] : memref<8x8x256xf32, #tpu.memory_space<vmem>>, vector<1x8x256xf32>
    %52 = vector.shape_cast %51 : vector<1x8x256xf32> to vector<8x256xf32>
    %53 = vector.shape_cast %49 : vector<8x256xf32> to vector<1x8x256xf32>
    tpu.vector_store %arg3[%50, %c0_28, %c0_29], %53 {strides = array<i32>} : memref<8x8x256xf32, #tpu.memory_space<vmem>>, vector<1x8x256xf32>,
    %cst_30 = arith.constant 0.000000e+00 : f32
    %54 = vector.broadcast %cst_30 : f32 to vector<8x256xf32>
    %55 = arith.select %47, %54, %45 : vector<8x256xi1>, vector<8x256xf32>
    %c0_31 = arith.constant 0 : index
    %c0_32 = arith.constant 0 : index
    %56 = vector.load %arg4[%c0_31, %c0_32] : memref<8x256xf32, #tpu.memory_space<vmem>>, vector<8x256xf32>
    tpu.vector_store %arg4[%c0_31, %c0_32], %55 {strides = array<i32>} : memref<8x256xf32, #tpu.memory_space<vmem>>, vector<8x256xf32>,
    %c3_i32 = arith.constant 3 : i32
    %c0_33 = arith.constant 0 : index
    %c0_34 = arith.constant 0 : index
    %57 = vector.load %arg4[%c0_33, %c0_34] : memref<8x256xf32, #tpu.memory_space<vmem>>, vector<8x256xf32>
    %cst_35 = arith.constant 5.000000e-01 : f32
    %58 = vector.broadcast %cst_35 : f32 to vector<8x256xf32>
    %59 = arith.mulf %57, %58 : vector<8x256xf32>
    %60 = arith.index_cast %c3_i32 : i32 to index
    %c0_36 = arith.constant 0 : index
    %c0_37 = arith.constant 0 : index
    %61 = vector.load %arg2[%60, %c0_36, %c0_37] : memref<8x8x256xf32, #tpu.memory_space<vmem>>, vector<1x8x256xf32>
    %62 = vector.shape_cast %61 : vector<1x8x256xf32> to vector<8x256xf32>
    %63 = arith.addf %59, %62 : vector<8x256xf32>
    %cst_38 = arith.constant 1.000000e+00 : f32
    %64 = vector.broadcast %cst_38 : f32 to vector<8x256xf32>
    %65 = arith.cmpf ogt, %63, %64 : vector<8x256xf32>
    %66 = arith.extui %65 : vector<8x256xi1> to vector<8x256xi32>
    %67 = arith.sitofp %66 : vector<8x256xi32> to vector<8x256xf32>
    %68 = arith.index_cast %c3_i32 : i32 to index
    %c0_39 = arith.constant 0 : index
    %c0_40 = arith.constant 0 : index
    %69 = vector.load %arg3[%68, %c0_39, %c0_40] : memref<8x8x256xf32, #tpu.memory_space<vmem>>, vector<1x8x256xf32>
    %70 = vector.shape_cast %69 : vector<1x8x256xf32> to vector<8x256xf32>
    %71 = vector.shape_cast %67 : vector<8x256xf32> to vector<1x8x256xf32>
    tpu.vector_store %arg3[%68, %c0_39, %c0_40], %71 {strides = array<i32>} : memref<8x8x256xf32, #tpu.memory_space<vmem>>, vector<1x8x256xf32>,
    %cst_41 = arith.constant 0.000000e+00 : f32
    %72 = vector.broadcast %cst_41 : f32 to vector<8x256xf32>
    %73 = arith.select %65, %72, %63 : vector<8x256xi1>, vector<8x256xf32>
    %c0_42 = arith.constant 0 : index
    %c0_43 = arith.constant 0 : index
    %74 = vector.load %arg4[%c0_42, %c0_43] : memref<8x256xf32, #tpu.memory_space<vmem>>, vector<8x256xf32>
    tpu.vector_store %arg4[%c0_42, %c0_43], %73 {strides = array<i32>} : memref<8x256xf32, #tpu.memory_space<vmem>>, vector<8x256xf32>,
    %c4_i32 = arith.constant 4 : i32
    %c0_44 = arith.constant 0 : index
    %c0_45 = arith.constant 0 : index
    %75 = vector.load %arg4[%c0_44, %c0_45] : memref<8x256xf32, #tpu.memory_space<vmem>>, vector<8x256xf32>
    %cst_46 = arith.constant 5.000000e-01 : f32
    %76 = vector.broadcast %cst_46 : f32 to vector<8x256xf32>
    %77 = arith.mulf %75, %76 : vector<8x256xf32>
    %78 = arith.index_cast %c4_i32 : i32 to index
    %c0_47 = arith.constant 0 : index
    %c0_48 = arith.constant 0 : index
    %79 = vector.load %arg2[%78, %c0_47, %c0_48] : memref<8x8x256xf32, #tpu.memory_space<vmem>>, vector<1x8x256xf32>
    %80 = vector.shape_cast %79 : vector<1x8x256xf32> to vector<8x256xf32>
    %81 = arith.addf %77, %80 : vector<8x256xf32>
    %cst_49 = arith.constant 1.000000e+00 : f32
    %82 = vector.broadcast %cst_49 : f32 to vector<8x256xf32>
    %83 = arith.cmpf ogt, %81, %82 : vector<8x256xf32>
    %84 = arith.extui %83 : vector<8x256xi1> to vector<8x256xi32>
    %85 = arith.sitofp %84 : vector<8x256xi32> to vector<8x256xf32>
    %86 = arith.index_cast %c4_i32 : i32 to index
    %c0_50 = arith.constant 0 : index
    %c0_51 = arith.constant 0 : index
    %87 = vector.load %arg3[%86, %c0_50, %c0_51] : memref<8x8x256xf32, #tpu.memory_space<vmem>>, vector<1x8x256xf32>
    %88 = vector.shape_cast %87 : vector<1x8x256xf32> to vector<8x256xf32>
    %89 = vector.shape_cast %85 : vector<8x256xf32> to vector<1x8x256xf32>
    tpu.vector_store %arg3[%86, %c0_50, %c0_51], %89 {strides = array<i32>} : memref<8x8x256xf32, #tpu.memory_space<vmem>>, vector<1x8x256xf32>,
    %cst_52 = arith.constant 0.000000e+00 : f32
    %90 = vector.broadcast %cst_52 : f32 to vector<8x256xf32>
    %91 = arith.select %83, %90, %81 : vector<8x256xi1>, vector<8x256xf32>
    %c0_53 = arith.constant 0 : index
    %c0_54 = arith.constant 0 : index
    %92 = vector.load %arg4[%c0_53, %c0_54] : memref<8x256xf32, #tpu.memory_space<vmem>>, vector<8x256xf32>
    tpu.vector_store %arg4[%c0_53, %c0_54], %91 {strides = array<i32>} : memref<8x256xf32, #tpu.memory_space<vmem>>, vector<8x256xf32>,
    %c5_i32 = arith.constant 5 : i32
    %c0_55 = arith.constant 0 : index
    %c0_56 = arith.constant 0 : index
    %93 = vector.load %arg4[%c0_55, %c0_56] : memref<8x256xf32, #tpu.memory_space<vmem>>, vector<8x256xf32>
    %cst_57 = arith.constant 5.000000e-01 : f32
    %94 = vector.broadcast %cst_57 : f32 to vector<8x256xf32>
    %95 = arith.mulf %93, %94 : vector<8x256xf32>
    %96 = arith.index_cast %c5_i32 : i32 to index
    %c0_58 = arith.constant 0 : index
    %c0_59 = arith.constant 0 : index
    %97 = vector.load %arg2[%96, %c0_58, %c0_59] : memref<8x8x256xf32, #tpu.memory_space<vmem>>, vector<1x8x256xf32>
    %98 = vector.shape_cast %97 : vector<1x8x256xf32> to vector<8x256xf32>
    %99 = arith.addf %95, %98 : vector<8x256xf32>
    %cst_60 = arith.constant 1.000000e+00 : f32
    %100 = vector.broadcast %cst_60 : f32 to vector<8x256xf32>
    %101 = arith.cmpf ogt, %99, %100 : vector<8x256xf32>
    %102 = arith.extui %101 : vector<8x256xi1> to vector<8x256xi32>
    %103 = arith.sitofp %102 : vector<8x256xi32> to vector<8x256xf32>
    %104 = arith.index_cast %c5_i32 : i32 to index
    %c0_61 = arith.constant 0 : index
    %c0_62 = arith.constant 0 : index
    %105 = vector.load %arg3[%104, %c0_61, %c0_62] : memref<8x8x256xf32, #tpu.memory_space<vmem>>, vector<1x8x256xf32>
    %106 = vector.shape_cast %105 : vector<1x8x256xf32> to vector<8x256xf32>
    %107 = vector.shape_cast %103 : vector<8x256xf32> to vector<1x8x256xf32>
    tpu.vector_store %arg3[%104, %c0_61, %c0_62], %107 {strides = array<i32>} : memref<8x8x256xf32, #tpu.memory_space<vmem>>, vector<1x8x256xf32>,
    %cst_63 = arith.constant 0.000000e+00 : f32
    %108 = vector.broadcast %cst_63 : f32 to vector<8x256xf32>
    %109 = arith.select %101, %108, %99 : vector<8x256xi1>, vector<8x256xf32>
    %c0_64 = arith.constant 0 : index
    %c0_65 = arith.constant 0 : index
    %110 = vector.load %arg4[%c0_64, %c0_65] : memref<8x256xf32, #tpu.memory_space<vmem>>, vector<8x256xf32>
    tpu.vector_store %arg4[%c0_64, %c0_65], %109 {strides = array<i32>} : memref<8x256xf32, #tpu.memory_space<vmem>>, vector<8x256xf32>,
    %c6_i32 = arith.constant 6 : i32
    %c0_66 = arith.constant 0 : index
    %c0_67 = arith.constant 0 : index
    %111 = vector.load %arg4[%c0_66, %c0_67] : memref<8x256xf32, #tpu.memory_space<vmem>>, vector<8x256xf32>
    %cst_68 = arith.constant 5.000000e-01 : f32
    %112 = vector.broadcast %cst_68 : f32 to vector<8x256xf32>
    %113 = arith.mulf %111, %112 : vector<8x256xf32>
    %114 = arith.index_cast %c6_i32 : i32 to index
    %c0_69 = arith.constant 0 : index
    %c0_70 = arith.constant 0 : index
    %115 = vector.load %arg2[%114, %c0_69, %c0_70] : memref<8x8x256xf32, #tpu.memory_space<vmem>>, vector<1x8x256xf32>
    %116 = vector.shape_cast %115 : vector<1x8x256xf32> to vector<8x256xf32>
    %117 = arith.addf %113, %116 : vector<8x256xf32>
    %cst_71 = arith.constant 1.000000e+00 : f32
    %118 = vector.broadcast %cst_71 : f32 to vector<8x256xf32>
    %119 = arith.cmpf ogt, %117, %118 : vector<8x256xf32>
    %120 = arith.extui %119 : vector<8x256xi1> to vector<8x256xi32>
    %121 = arith.sitofp %120 : vector<8x256xi32> to vector<8x256xf32>
    %122 = arith.index_cast %c6_i32 : i32 to index
    %c0_72 = arith.constant 0 : index
    %c0_73 = arith.constant 0 : index
    %123 = vector.load %arg3[%122, %c0_72, %c0_73] : memref<8x8x256xf32, #tpu.memory_space<vmem>>, vector<1x8x256xf32>
    %124 = vector.shape_cast %123 : vector<1x8x256xf32> to vector<8x256xf32>
    %125 = vector.shape_cast %121 : vector<8x256xf32> to vector<1x8x256xf32>
    tpu.vector_store %arg3[%122, %c0_72, %c0_73], %125 {strides = array<i32>} : memref<8x8x256xf32, #tpu.memory_space<vmem>>, vector<1x8x256xf32>,
    %cst_74 = arith.constant 0.000000e+00 : f32
    %126 = vector.broadcast %cst_74 : f32 to vector<8x256xf32>
    %127 = arith.select %119, %126, %117 : vector<8x256xi1>, vector<8x256xf32>
    %c0_75 = arith.constant 0 : index
    %c0_76 = arith.constant 0 : index
    %128 = vector.load %arg4[%c0_75, %c0_76] : memref<8x256xf32, #tpu.memory_space<vmem>>, vector<8x256xf32>
    tpu.vector_store %arg4[%c0_75, %c0_76], %127 {strides = array<i32>} : memref<8x256xf32, #tpu.memory_space<vmem>>, vector<8x256xf32>,
    %c7_i32 = arith.constant 7 : i32
    %c0_77 = arith.constant 0 : index
    %c0_78 = arith.constant 0 : index
    %129 = vector.load %arg4[%c0_77, %c0_78] : memref<8x256xf32, #tpu.memory_space<vmem>>, vector<8x256xf32>
    %cst_79 = arith.constant 5.000000e-01 : f32
    %130 = vector.broadcast %cst_79 : f32 to vector<8x256xf32>
    %131 = arith.mulf %129, %130 : vector<8x256xf32>
    %132 = arith.index_cast %c7_i32 : i32 to index
    %c0_80 = arith.constant 0 : index
    %c0_81 = arith.constant 0 : index
    %133 = vector.load %arg2[%132, %c0_80, %c0_81] : memref<8x8x256xf32, #tpu.memory_space<vmem>>, vector<1x8x256xf32>
    %134 = vector.shape_cast %133 : vector<1x8x256xf32> to vector<8x256xf32>
    %135 = arith.addf %131, %134 : vector<8x256xf32>
    %cst_82 = arith.constant 1.000000e+00 : f32
    %136 = vector.broadcast %cst_82 : f32 to vector<8x256xf32>
    %137 = arith.cmpf ogt, %135, %136 : vector<8x256xf32>
    %138 = arith.extui %137 : vector<8x256xi1> to vector<8x256xi32>
    %139 = arith.sitofp %138 : vector<8x256xi32> to vector<8x256xf32>
    %140 = arith.index_cast %c7_i32 : i32 to index
    %c0_83 = arith.constant 0 : index
    %c0_84 = arith.constant 0 : index
    %141 = vector.load %arg3[%140, %c0_83, %c0_84] : memref<8x8x256xf32, #tpu.memory_space<vmem>>, vector<1x8x256xf32>
    %142 = vector.shape_cast %141 : vector<1x8x256xf32> to vector<8x256xf32>
    %143 = vector.shape_cast %139 : vector<8x256xf32> to vector<1x8x256xf32>
    tpu.vector_store %arg3[%140, %c0_83, %c0_84], %143 {strides = array<i32>} : memref<8x8x256xf32, #tpu.memory_space<vmem>>, vector<1x8x256xf32>,
    %cst_85 = arith.constant 0.000000e+00 : f32
    %144 = vector.broadcast %cst_85 : f32 to vector<8x256xf32>
    %145 = arith.select %137, %144, %135 : vector<8x256xi1>, vector<8x256xf32>
    %c0_86 = arith.constant 0 : index
    %c0_87 = arith.constant 0 : index
    %146 = vector.load %arg4[%c0_86, %c0_87] : memref<8x256xf32, #tpu.memory_space<vmem>>, vector<8x256xf32>
    tpu.vector_store %arg4[%c0_86, %c0_87], %145 {strides = array<i32>} : memref<8x256xf32, #tpu.memory_space<vmem>>, vector<8x256xf32>,
    %c8_i32 = arith.constant 8 : i32
    return
  }
  func.func @transform_0(%arg0: i32, %arg1: i32) -> (i32, i32, i32) {
    %c0_i32 = arith.constant 0 : i32
    %c0_i32_0 = arith.constant 0 : i32
    return %arg1, %arg0, %c0_i32 : i32, i32, i32
  }
  func.func @transform_1(%arg0: i32, %arg1: i32) -> (i32, i32, i32) {
    %c0_i32 = arith.constant 0 : i32
    %c0_i32_0 = arith.constant 0 : i32
    return %arg1, %arg0, %c0_i32 : i32, i32, i32
  }
}

</mosaic_0001>

<llo_original>
// kernel: tpu_custom_call.1
$region0: #{tpu_custom_call.1}
  #allocation0 [shape = 'u32[]', space=smem, size = 0x4, offset = 0x4, fixed_abs, tag = 'smem constant byte address 0x4 - core index']
  #allocation1 [shape = 'u32[72,128]{1,0:T(1,128)}', space=vmem, size = 0x9000, scoped, tag = 'internal scratch']
  #allocation2 [shape = 'f32[8,256]{1,0:T(8,128)}', space=vmem, size = 0x2000, scoped, tag = 'scratch operand']
  %s0 = inlined_call_operand.hbm [shape: f32[8,8,256], index: 0, kind: input, shape index: {}]
  %s1 = inlined_call_operand.hbm [shape: f32[8,8,256], index: 1, kind: output, shape index: {}]
  %s2 = sld [smem:[#allocation0]]
  $region22: #{tpu_custom_call.1} parent=0
    _
  %s4 = ssub.s32 1, %s2
  %s5 = scalar_select 0, %s4, %s2
  $region1: #{tpu_custom_call.1} parent=0
    #allocation3 [shape = 'u8[65536]{0}', space=vmem, size = 0x10000, scoped, tag = 'input window, operand 0, single buffered']
    #allocation4 [shape = 's32[1]{0}', space=sflag, size = 0x4, scoped, tag = 'scoped memory for tpu_custom_call.1']
    #allocation5 [shape = 's32[1]{0}', space=sflag, size = 0x4, scoped, tag = 'scoped memory for tpu_custom_call.1']
    #allocation6 [shape = 'u8[65536]{0}', space=vmem, size = 0x10000, scoped, tag = 'output window, operand 0, single buffered']
    %6 = vsyncpa [#allocation4], 0
    %7 = vsyncpa [#allocation5], 0
    // Predicated region
    $region2: #{tpu_custom_call.1} parent=1 // pred_check
      _
    $region3: #{tpu_custom_call.1} parent=1 // pred_check_branch
      %9 = sbr.rel (0) target = $region5
    $region4: #{tpu_custom_call.1} parent=1 // pred_region
      %11 = vsyncadd [#allocation4], 0
      %s12 = sshll.u32 %s0, 4
      %s13 = int_to_ptr.hbm [resolvable:$true] %s12
      %s14 = sshll.u32 [#allocation3], 4
      %s15 = int_to_ptr.vmem [resolvable:$true] %s14
      %20 = dma.hbm_to_vmem [thread:$0]  %s13, 2048, %s15, [#allocation4], 256, 256, 16
    $region5: #{tpu_custom_call.1} parent=1 // pred_fallthru
      _
    // Predicated region
    $region6: #{tpu_custom_call.1} parent=1 // pred_check
      _
    $region7: #{tpu_custom_call.1} parent=1 // pred_check_branch
      %22 = sbr.rel (0) target = $region9
    $region8: #{tpu_custom_call.1} parent=1 // pred_region
      %24 = dma.done [#allocation4], 2048
    $region9: #{tpu_custom_call.1} parent=1 // pred_fallthru
      _
    %p25 = scmp.eq.s32.totalorder 0, 0
    // Predicated region
    $region10: #{tpu_custom_call.1} parent=1 // pred_check
      %p26 = pneg %p25
    $region11: #{tpu_custom_call.1} parent=1 // pred_check_branch
      %28 = sbr.rel (%p26) target = $region13
    $region12: #{tpu_custom_call.1} parent=1 // pred_region
      %29 = vst [vmem:[#allocation2] sm:$0xff] 0.0
      %30 = vst [vmem:[#allocation2 + $0x8] sm:$0xff] 0.0
    $region13: #{tpu_custom_call.1} parent=1 // pred_fallthru
      _
    %v31 = vld [vmem:[#allocation2] sm:$0xff]
    %v32 = vld [vmem:[#allocation2 + $0x8] sm:$0xff]
    %v33 = vmul.f32 %v31, 0.5
    %v34 = vmul.f32 %v32, 0.5
    %v35 = vld [vmem:[#allocation3] sm:$0xff]
    %v36 = vld [vmem:[#allocation3 + $0x8] sm:$0xff]
    %v37 = vadd.f32 %v33, %v35
    %v38 = vadd.f32 %v34, %v36
    %vm39 = vcmp.gt.f32.partialorder %v37, 1.0
    %vm40 = vcmp.gt.f32.partialorder %v38, 1.0
    %v41 = vsel %vm39, 1, 0
    %v42 = vsel %vm40, 1, 0
    %v43 = vcvt.s32.f32 %v41
    %v44 = vcvt.s32.f32 %v42
    %45 = vst [vmem:[#allocation6] sm:$0xff] %v43
    %46 = vst [vmem:[#allocation6 + $0x8] sm:$0xff] %v44
    %v47 = vsel %vm39, 0.0, %v37
    %v48 = vsel %vm40, 0.0, %v38
    %49 = vst [vmem:[#allocation2] sm:$0xff] %v47
    %50 = vst [vmem:[#allocation2 + $0x8] sm:$0xff] %v48
    %v51 = vld [vmem:[#allocation2] sm:$0xff]
    %v52 = vld [vmem:[#allocation2 + $0x8] sm:$0xff]
    %v53 = vmul.f32 %v51, 0.5
    %v54 = vmul.f32 %v52, 0.5
    %s55 = scalar_lea.vmem [#allocation3], 16
    %v56 = vld [vmem:[%s55] sm:$0xff]
    %v57 = vld [vmem:[%s55 + $0x8] sm:$0xff]
    %v58 = vadd.f32 %v53, %v56
    %v59 = vadd.f32 %v54, %v57
    %vm60 = vcmp.gt.f32.partialorder %v58, 1.0
    %vm61 = vcmp.gt.f32.partialorder %v59, 1.0
    %v62 = vsel %vm60, 1, 0
    %v63 = vsel %vm61, 1, 0
    %v64 = vcvt.s32.f32 %v62
    %v65 = vcvt.s32.f32 %v63
    %s66 = scalar_lea.vmem [#allocation6], 16
    %67 = vst [vmem:[%s66] sm:$0xff] %v64
    %68 = vst [vmem:[%s66 + $0x8] sm:$0xff] %v65
    %v69 = vsel %vm60, 0.0, %v58
    %v70 = vsel %vm61, 0.0, %v59
    %71 = vst [vmem:[#allocation2] sm:$0xff] %v69
    %72 = vst [vmem:[#allocation2 + $0x8] sm:$0xff] %v70
    %v73 = vld [vmem:[#allocation2] sm:$0xff]
    %v74 = vld [vmem:[#allocation2 + $0x8] sm:$0xff]
    %v75 = vmul.f32 %v73, 0.5
    %v76 = vmul.f32 %v74, 0.5
    %s77 = scalar_lea.vmem [#allocation3], 32
    %v78 = vld [vmem:[%s77] sm:$0xff]
    %v79 = vld [vmem:[%s77 + $0x8] sm:$0xff]
    %v80 = vadd.f32 %v75, %v78
    %v81 = vadd.f32 %v76, %v79
    %vm82 = vcmp.gt.f32.partialorder %v80, 1.0
    %vm83 = vcmp.gt.f32.partialorder %v81, 1.0
    %v84 = vsel %vm82, 1, 0
    %v85 = vsel %vm83, 1, 0
    %v86 = vcvt.s32.f32 %v84
    %v87 = vcvt.s32.f32 %v85
    %s88 = scalar_lea.vmem [#allocation6], 32
    %89 = vst [vmem:[%s88] sm:$0xff] %v86
    %90 = vst [vmem:[%s88 + $0x8] sm:$0xff] %v87
    %v91 = vsel %vm82, 0.0, %v80
    %v92 = vsel %vm83, 0.0, %v81
    %93 = vst [vmem:[#allocation2] sm:$0xff] %v91
    %94 = vst [vmem:[#allocation2 + $0x8] sm:$0xff] %v92
    %v95 = vld [vmem:[#allocation2] sm:$0xff]
    %v96 = vld [vmem:[#allocation2 + $0x8] sm:$0xff]
    %v97 = vmul.f32 %v95, 0.5
    %v98 = vmul.f32 %v96, 0.5
    %s99 = scalar_lea.vmem [#allocation3], 48
    %v100 = vld [vmem:[%s99] sm:$0xff]
    %v101 = vld [vmem:[%s99 + $0x8] sm:$0xff]
    %v102 = vadd.f32 %v97, %v100
    %v103 = vadd.f32 %v98, %v101
    %vm104 = vcmp.gt.f32.partialorder %v102, 1.0
    %vm105 = vcmp.gt.f32.partialorder %v103, 1.0
    %v106 = vsel %vm104, 1, 0
    %v107 = vsel %vm105, 1, 0
    %v108 = vcvt.s32.f32 %v106
    %v109 = vcvt.s32.f32 %v107
    %s110 = scalar_lea.vmem [#allocation6], 48
    %111 = vst [vmem:[%s110] sm:$0xff] %v108
    %112 = vst [vmem:[%s110 + $0x8] sm:$0xff] %v109
    %v113 = vsel %vm104, 0.0, %v102
    %v114 = vsel %vm105, 0.0, %v103
    %115 = vst [vmem:[#allocation2] sm:$0xff] %v113
    %116 = vst [vmem:[#allocation2 + $0x8] sm:$0xff] %v114
    %v117 = vld [vmem:[#allocation2] sm:$0xff]
    %v118 = vld [vmem:[#allocation2 + $0x8] sm:$0xff]
    %v119 = vmul.f32 %v117, 0.5
    %v120 = vmul.f32 %v118, 0.5
    %s121 = scalar_lea.vmem [#allocation3], 64
    %v122 = vld [vmem:[%s121] sm:$0xff]
    %v123 = vld [vmem:[%s121 + $0x8] sm:$0xff]
    %v124 = vadd.f32 %v119, %v122
    %v125 = vadd.f32 %v120, %v123
    %vm126 = vcmp.gt.f32.partialorder %v124, 1.0
    %vm127 = vcmp.gt.f32.partialorder %v125, 1.0
    %v128 = vsel %vm126, 1, 0
    %v129 = vsel %vm127, 1, 0
    %v130 = vcvt.s32.f32 %v128
    %v131 = vcvt.s32.f32 %v129
    %s132 = scalar_lea.vmem [#allocation6], 64
    %133 = vst [vmem:[%s132] sm:$0xff] %v130
    %134 = vst [vmem:[%s132 + $0x8] sm:$0xff] %v131
    %v135 = vsel %vm126, 0.0, %v124
    %v136 = vsel %vm127, 0.0, %v125
    %137 = vst [vmem:[#allocation2] sm:$0xff] %v135
    %138 = vst [vmem:[#allocation2 + $0x8] sm:$0xff] %v136
    %v139 = vld [vmem:[#allocation2] sm:$0xff]
    %v140 = vld [vmem:[#allocation2 + $0x8] sm:$0xff]
    %v141 = vmul.f32 %v139, 0.5
    %v142 = vmul.f32 %v140, 0.5
    %s143 = scalar_lea.vmem [#allocation3], 80
    %v144 = vld [vmem:[%s143] sm:$0xff]
    %v145 = vld [vmem:[%s143 + $0x8] sm:$0xff]
    %v146 = vadd.f32 %v141, %v144
    %v147 = vadd.f32 %v142, %v145
    %vm148 = vcmp.gt.f32.partialorder %v146, 1.0
    %vm149 = vcmp.gt.f32.partialorder %v147, 1.0
    %v150 = vsel %vm148, 1, 0
    %v151 = vsel %vm149, 1, 0
    %v152 = vcvt.s32.f32 %v150
    %v153 = vcvt.s32.f32 %v151
    %s154 = scalar_lea.vmem [#allocation6], 80
    %155 = vst [vmem:[%s154] sm:$0xff] %v152
    %156 = vst [vmem:[%s154 + $0x8] sm:$0xff] %v153
    %v157 = vsel %vm148, 0.0, %v146
    %v158 = vsel %vm149, 0.0, %v147
    %159 = vst [vmem:[#allocation2] sm:$0xff] %v157
    %160 = vst [vmem:[#allocation2 + $0x8] sm:$0xff] %v158
    %v161 = vld [vmem:[#allocation2] sm:$0xff]
    %v162 = vld [vmem:[#allocation2 + $0x8] sm:$0xff]
    %v163 = vmul.f32 %v161, 0.5
    %v164 = vmul.f32 %v162, 0.5
    %s165 = scalar_lea.vmem [#allocation3], 96
    %v166 = vld [vmem:[%s165] sm:$0xff]
    %v167 = vld [vmem:[%s165 + $0x8] sm:$0xff]
    %v168 = vadd.f32 %v163, %v166
    %v169 = vadd.f32 %v164, %v167
    %vm170 = vcmp.gt.f32.partialorder %v168, 1.0
    %vm171 = vcmp.gt.f32.partialorder %v169, 1.0
    %v172 = vsel %vm170, 1, 0
    %v173 = vsel %vm171, 1, 0
    %v174 = vcvt.s32.f32 %v172
    %v175 = vcvt.s32.f32 %v173
    %s176 = scalar_lea.vmem [#allocation6], 96
    %177 = vst [vmem:[%s176] sm:$0xff] %v174
    %178 = vst [vmem:[%s176 + $0x8] sm:$0xff] %v175
    %v179 = vsel %vm170, 0.0, %v168
    %v180 = vsel %vm171, 0.0, %v169
    %181 = vst [vmem:[#allocation2] sm:$0xff] %v179
    %182 = vst [vmem:[#allocation2 + $0x8] sm:$0xff] %v180
    %v183 = vld [vmem:[#allocation2] sm:$0xff]
    %v184 = vld [vmem:[#allocation2 + $0x8] sm:$0xff]
    %v185 = vmul.f32 %v183, 0.5
    %v186 = vmul.f32 %v184, 0.5
    %s187 = scalar_lea.vmem [#allocation3], 112
    %v188 = vld [vmem:[%s187] sm:$0xff]
    %v189 = vld [vmem:[%s187 + $0x8] sm:$0xff]
    %v190 = vadd.f32 %v185, %v188
    %v191 = vadd.f32 %v186, %v189
    %vm192 = vcmp.gt.f32.partialorder %v190, 1.0
    %vm193 = vcmp.gt.f32.partialorder %v191, 1.0
    %v194 = vsel %vm192, 1, 0
    %v195 = vsel %vm193, 1, 0
    %v196 = vcvt.s32.f32 %v194
    %v197 = vcvt.s32.f32 %v195
    %s198 = scalar_lea.vmem [#allocation6], 112
    %199 = vst [vmem:[%s198] sm:$0xff] %v196
    %200 = vst [vmem:[%s198 + $0x8] sm:$0xff] %v197
    %v201 = vsel %vm192, 0.0, %v190
    %v202 = vsel %vm193, 0.0, %v191
    %203 = vst [vmem:[#allocation2] sm:$0xff] %v201
    %204 = vst [vmem:[#allocation2 + $0x8] sm:$0xff] %v202
    // Predicated region
    $region14: #{tpu_custom_call.1} parent=1 // pred_check
      _
    $region15: #{tpu_custom_call.1} parent=1 // pred_check_branch
      %206 = sbr.rel (0) target = $region17
    $region16: #{tpu_custom_call.1} parent=1 // pred_region
      %208 = vsyncadd [#allocation5], 0
      %s209 = sshll.u32 [#allocation6], 4
      %s210 = int_to_ptr.vmem [resolvable:$true] %s209
      %s211 = sshll.u32 %s1, 4
      %s212 = int_to_ptr.hbm [resolvable:$true] %s211
      %217 = dma.vmem_to_hbm [thread:$0]  %s210, 2048, %s212, [#allocation5], 256, 256, 16
    $region17: #{tpu_custom_call.1} parent=1 // pred_fallthru
      _
    // Predicated region
    $region18: #{tpu_custom_call.1} parent=1 // pred_check
      _
    $region19: #{tpu_custom_call.1} parent=1 // pred_check_branch
      %219 = sbr.rel (0) target = $region21
    $region20: #{tpu_custom_call.1} parent=1 // pred_region
      %221 = dma.done [#allocation5], 2048
    $region21: #{tpu_custom_call.1} parent=1 // pred_fallthru
      _
    %222 = vsyncpa [#allocation4], 1
    %223 = vsyncpa [#allocation5], 1

</llo_original>
